<compile_context>
chip_gen: v5e
topology: v5e:2x2
jax: 0.10.0
libtpu: 0.0.40
codegen_flags: <defaults>
</compile_context>

<pallas_src>
import jax
import jax.numpy as jnp
from jax import lax
from jax.experimental import pallas as pl
from jax.experimental.pallas import tpu as pltpu


def affine_kernel(x_ref, wt_ref, bt_ref, o_ref):
    # x_ref : [tb, 12]  (batch on sublanes, features on lanes - caller layout)
    # wt_ref: [2, 12]   (pre-composed W, transposed)
    # bt_ref: [2, 1]    (pre-composed bias, transposed)
    # o_ref : [2, tb]   (lane-dense: batch on the 128-lane axis)
    acc = lax.dot_general(
        wt_ref[...], x_ref[...],
        dimension_numbers=(((1,), (1,)), ((), ())),   # contract the 12-feature axis
        preferred_element_type=jnp.float32,
    )                                                  # -> [2, tb]
    o_ref[...] = (acc + bt_ref[...]).astype(o_ref.dtype)


def _choose_batch_tile(batch, batch_tile):
    """Pick a row tile.

    Tiles are multiples of 128 (lane-dense output blocks) unless a single
    block covers the whole batch.  For mid-size batches we still split into
    2 blocks so v7x's two TensorCores can both work on the parallel axis.
    """
    if batch > batch_tile:
        return batch_tile                                  # ragged tail handled by cdiv grid
    if batch >= 2048:
        half = (batch + 1) // 2
        return ((half + 127) // 128) * 128                 # ~batch/2, lane multiple -> 2 steps
    return batch                                           # single full-extent block


def mlp_forward(x, w1, b1, w2, b2, w3, b3, *, batch_tile=8192):
    """Forward pass equivalent to fc3(fc2(fc1(x))) (no activations)."""
    assert batch_tile % 128 == 0

    # Collapse the bias-only linear chain into one affine map (exact algebra).
    w = w1 @ w2 @ w3                      # [12, 2]
    b = (b1 @ w2 + b2) @ w3 + b3          # [1, 2]
    wt = w.T                              # [2, 12]
    bt = b.T                              # [2, 1]

    batch, in_features = x.shape
    out_features = wt.shape[0]

    tb = _choose_batch_tile(batch, batch_tile)
    grid = (pl.cdiv(batch, tb),)

    cost = pl.CostEstimate(
        flops=2 * batch * in_features * out_features,
        transcendentals=0,
        bytes_accessed=4 * batch * (in_features + out_features),
    )

    out_t = pl.pallas_call(
        affine_kernel,
        out_shape=jax.ShapeDtypeStruct((out_features, batch), x.dtype),
        grid=grid,
        in_specs=[
            pl.BlockSpec((tb, in_features), lambda i: (i, 0)),
            # Constant index_map -> weights/bias DMA'd once, VMEM-resident.
            pl.BlockSpec((out_features, in_features), lambda i: (0, 0)),
            pl.BlockSpec((out_features, 1), lambda i: (0, 0)),
        ],
        out_specs=pl.BlockSpec((out_features, tb), lambda i: (0, i)),
        compiler_params=pltpu.CompilerParams(
            dimension_semantics=("parallel",),
            vmem_limit_bytes=32 * 1024 * 1024,
        ),
        cost_estimate=cost,
    )(x, wt, bt)

    # Tiny [2, batch] -> [batch, 2] transpose back to the caller's layout.
    return out_t.T


def init_params(key):
    # Mirrors nn.Linear shapes, stored transposed as [in, out]:
    #   fc1: w1 [12, 10], b1 [1, 10]
    #   fc2: w2 [10, 5],  b2 [1, 5]
    #   fc3: w3 [5, 2],   b3 [1, 2]
    ks = jax.random.split(key, 6)

    def uniform(k, shape, fan_in):
        bound = 1.0 / jnp.sqrt(fan_in)
        return jax.random.uniform(k, shape, jnp.float32, -bound, bound)

    w1 = uniform(ks[0], (12, 10), 12.0)
    b1 = uniform(ks[1], (1, 10), 12.0)
    w2 = uniform(ks[2], (10, 5), 10.0)
    b2 = uniform(ks[3], (1, 5), 10.0)
    w3 = uniform(ks[4], (5, 2), 5.0)
    b3 = uniform(ks[5], (1, 2), 5.0)
    return w1, b1, w2, b2, w3, b3


def _reference(x, params):
    w1, b1, w2, b2, w3, b3 = params
    return ((x @ w1 + b1) @ w2 + b2) @ w3 + b3


if __name__ == "__main__":
    key = jax.random.PRNGKey(0)
    k_x, k_x2, k_p = jax.random.split(key, 3)
    params = init_params(k_p)

    # Small demo batch (single full-extent block path).
    batch = 8
    x = jax.random.normal(k_x, (batch, 12), jnp.float32)
    out = mlp_forward(x, *params)
    jax.block_until_ready(out)
    ref = _reference(x, params)
    assert out.shape == (batch, 2)
    assert jnp.allclose(out, ref, atol=1e-4, rtol=1e-4), (
        f"max abs err {jnp.max(jnp.abs(out - ref))}")

    # Mid-size non-divisible batch: exercises the cdiv grid / ragged last
    # block and the 2-step tiling used for v7x megacore sharding.
    batch2 = 2500
    x2 = jax.random.normal(k_x2, (batch2, 12), jnp.float32)
    out2 = mlp_forward(x2, *params)
    jax.block_until_ready(out2)
    ref2 = _reference(x2, params)
    assert out2.shape == (batch2, 2)
    assert jnp.allclose(out2, ref2, atol=1e-4, rtol=1e-4), (
        f"max abs err {jnp.max(jnp.abs(out2 - ref2))}")

    print("KERNEL_OK")
</pallas_src>

<mosaic_0001>
module attributes {stable_mosaic.version = 11 : i64} {
  func.func @affine_kernel(%arg0: i32, %arg1: memref<8x12xf32, #tpu.memory_space<vmem>>, %arg2: memref<2x12xf32, #tpu.memory_space<vmem>>, %arg3: memref<2x1xf32, #tpu.memory_space<vmem>>, %arg4: memref<2x8xf32, #tpu.memory_space<vmem>>) attributes {dimension_semantics = [#tpu.dimension_semantics<parallel>], iteration_bounds = array<i64: 1>, scalar_prefetch = 0 : i64, scratch_operands = 0 : i64, tpu.core_type = #tpu.core_type<tc>, window_params = [{transform_indices = @transform_0, window_bounds = array<i64: 8, 12>}, {pipeline_mode = #tpu.pipeline_mode<synchronous>, transform_indices = @transform_1, window_bounds = array<i64: 2, 12>}, {pipeline_mode = #tpu.pipeline_mode<synchronous>, transform_indices = @transform_2, window_bounds = array<i64: 2, 1>}, {transform_indices = @transform_3, window_bounds = array<i64: 2, 8>}]} {
    %c0 = arith.constant 0 : index
    %c0_0 = arith.constant 0 : index
    %0 = vector.load %arg2[%c0, %c0_0] : memref<2x12xf32, #tpu.memory_space<vmem>>, vector<2x12xf32>
    %c0_1 = arith.constant 0 : index
    %c0_2 = arith.constant 0 : index
    %1 = vector.load %arg1[%c0_1, %c0_2] : memref<8x12xf32, #tpu.memory_space<vmem>>, vector<8x12xf32>
    %cst = arith.constant dense<0.000000e+00> : vector<2x8xf32>
    %2 = tpu.matmul %0, %1, %cst {dimension_numbers = #tpu.dot_dimension_numbers<[1], [1], [0], [0], [0, 0, 1, 0], [], []>} : vector<2x12xf32>, vector<8x12xf32>, vector<2x8xf32> -> vector<2x8xf32>
    %c0_3 = arith.constant 0 : index
    %c0_4 = arith.constant 0 : index
    %3 = vector.load %arg3[%c0_3, %c0_4] : memref<2x1xf32, #tpu.memory_space<vmem>>, vector<2x1xf32>
    %4 = vector.broadcast %3 : vector<2x1xf32> to vector<2x8xf32>
    %5 = arith.addf %2, %4 : vector<2x8xf32>
    %c0_5 = arith.constant 0 : index
    %c0_6 = arith.constant 0 : index
    %6 = vector.load %arg4[%c0_5, %c0_6] : memref<2x8xf32, #tpu.memory_space<vmem>>, vector<2x8xf32>
    tpu.vector_store %arg4[%c0_5, %c0_6], %5 {strides = array<i32>} : memref<2x8xf32, #tpu.memory_space<vmem>>, vector<2x8xf32>,
    return
  }
  func.func @transform_0(%arg0: i32) -> (i32, i32) {
    %c0_i32 = arith.constant 0 : i32
    %c0_i32_0 = arith.constant 0 : i32
    return %arg0, %c0_i32 : i32, i32
  }
  func.func @transform_1(%arg0: i32) -> (i32, i32) {
    %c0_i32 = arith.constant 0 : i32
    %c0_i32_0 = arith.constant 0 : i32
    %c0_i32_1 = arith.constant 0 : i32
    return %c0_i32, %c0_i32_0 : i32, i32
  }
  func.func @transform_2(%arg0: i32) -> (i32, i32) {
    %c0_i32 = arith.constant 0 : i32
    %c0_i32_0 = arith.constant 0 : i32
    %c0_i32_1 = arith.constant 0 : i32
    return %c0_i32, %c0_i32_0 : i32, i32
  }
  func.func @transform_3(%arg0: i32) -> (i32, i32) {
    %c0_i32 = arith.constant 0 : i32
    %c0_i32_0 = arith.constant 0 : i32
    return %c0_i32, %arg0 : i32, i32
  }
}

</mosaic_0001>

<llo_original>
// kernel: tpu_custom_call.1
$region0: #{tpu_custom_call.1}
  #allocation0 [shape = 'u32[]', space=smem, size = 0x4, offset = 0x4, fixed_abs, tag = 'smem constant byte address 0x4 - core index']
  #allocation1 [shape = 'u32[72,128]{1,0:T(1,128)}', space=vmem, size = 0x9000, scoped, tag = 'internal scratch']
  %s0 = inlined_call_operand.hbm [shape: f32[8,12], index: 0, kind: input, shape index: {}]
  %s1 = inlined_call_operand.vmem [shape: f32[2,12], index: 1, kind: input, shape index: {}]
  %s2 = inlined_call_operand.vmem [shape: f32[2,1], index: 2, kind: input, shape index: {}]
  %s3 = inlined_call_operand.hbm [shape: f32[2,8], index: 3, kind: output, shape index: {}]
  %s4 = sld [smem:[#allocation0]]
  $region26: #{tpu_custom_call.1} parent=0
    _
  %s6 = ssub.s32 1, %s4
  %s7 = scalar_select 0, %s6, %s4
  $region1: #{tpu_custom_call.1} parent=0
    #allocation2 [shape = 'u8[4096]{0}', space=vmem, size = 0x1000, scoped, tag = 'input window, operand 0, single buffered']
    #allocation3 [shape = 's32[1]{0}', space=sflag, size = 0x4, scoped, tag = 'scoped memory for tpu_custom_call.1']
    #allocation4 [shape = 's32[1]{0}', space=sflag, size = 0x4, scoped, tag = 'scoped memory for tpu_custom_call.1']
    #allocation5 [shape = 'u8[1024]{0}', space=vmem, size = 0x400, scoped, tag = 'output window, operand 0, single buffered']
    %8 = vsyncpa [#allocation3], 0
    %9 = vsyncpa [#allocation4], 0
    // Predicated region
    $region2: #{tpu_custom_call.1} parent=1 // pred_check
      _
    $region3: #{tpu_custom_call.1} parent=1 // pred_check_branch
      %11 = sbr.rel (0) target = $region5
    $region4: #{tpu_custom_call.1} parent=1 // pred_region
      %13 = vsyncadd [#allocation3], 0
      %s15 = sshll.u32 %s0, 4
      %s16 = int_to_ptr.hbm [resolvable:$true] %s15
      %s17 = sshll.u32 [#allocation2], 4
      %s18 = int_to_ptr.vmem [resolvable:$true] %s17
      %20 = dma.hbm_to_vmem [thread:$0]  %s16, 128, %s18, [#allocation3]
    $region5: #{tpu_custom_call.1} parent=1 // pred_fallthru
      _
    // Predicated region
    $region6: #{tpu_custom_call.1} parent=1 // pred_check
      _
    $region7: #{tpu_custom_call.1} parent=1 // pred_check_branch
      %22 = sbr.rel (0) target = $region9
    $region8: #{tpu_custom_call.1} parent=1 // pred_region
      _
    $region9: #{tpu_custom_call.1} parent=1 // pred_fallthru
      _
    // Predicated region
    $region10: #{tpu_custom_call.1} parent=1 // pred_check
      _
    $region11: #{tpu_custom_call.1} parent=1 // pred_check_branch
      %24 = sbr.rel (0) target = $region13
    $region12: #{tpu_custom_call.1} parent=1 // pred_region
      _
    $region13: #{tpu_custom_call.1} parent=1 // pred_fallthru
      _
    // Predicated region
    $region14: #{tpu_custom_call.1} parent=1 // pred_check
      _
    $region15: #{tpu_custom_call.1} parent=1 // pred_check_branch
      %26 = sbr.rel (0) target = $region17
    $region16: #{tpu_custom_call.1} parent=1 // pred_region
      %28 = dma.done [#allocation3], 128
    $region17: #{tpu_custom_call.1} parent=1 // pred_fallthru
      _
    %v29 = vld [vmem:[%s1] sm:$0x3]
    %v30 = vld [vmem:[#allocation2] sm:$0xff]
    %v31 = vld [vmem:[%s2] sm:$0x3]
    %33 = vset.pattern.permute.xlu0 0
    %34 = vperm.xlu0 %33, %v31
    %v35 = vpop.permute.xlu0 %34
    %vm37 = vcmask 97280
    %v39 = vsel %vm37, %v29, 0
    %v42 = vsel %vm37, %v30, 0
    %44 = vmatpush.xpose.msra.mxu0 0.0
    %45 = vmatpush.xpose.msra.mxu0 0.0
    %46 = vmatpush.xpose.msra.mxu0 0.0
    %47 = vmatpush.xpose.msra.mxu0 0.0
    %48 = vmatpush.xpose.msra.mxu0 0.0
    %49 = vmatpush.xpose.msra.mxu0 0.0
    %50 = vmatpush.xpose.msra.mxu0 0.0
    %51 = vmatpush.xpose.msra.mxu0 0.0
    %52 = vmatpush.xpose.msra.mxu0 0.0
    %53 = vmatpush.xpose.msra.mxu0 0.0
    %54 = vmatpush.xpose.msra.mxu0 0.0
    %55 = vmatpush.xpose.msra.mxu0 0.0
    %56 = vmatpush.xpose.msra.mxu0 0.0
    %57 = vmatpush.xpose.msra.mxu0 0.0
    %58 = vmatpush.xpose.msra.mxu0 0.0
    %59 = vmatpush.xpose.msra.mxu0 %v42
    %60 = vmatmul.f32.gmra.mxu0 %v39
    %v61 = vpop.f32.mrf.mxu0
    %v62 = vadd.f32 %v35, %v61
    %63 = vdwg.mxu0
    %vm64 = vcmask 58368
    %65 = vst.msk [vmem:[#allocation5] sm:$0x3] %vm64, %v62
    // Predicated region
    $region18: #{tpu_custom_call.1} parent=1 // pred_check
      _
    $region19: #{tpu_custom_call.1} parent=1 // pred_check_branch
      %67 = sbr.rel (0) target = $region21
    $region20: #{tpu_custom_call.1} parent=1 // pred_region
      %69 = vsyncadd [#allocation4], 0
      %s71 = sshll.u32 [#allocation5], 4
      %s72 = int_to_ptr.vmem [resolvable:$true] %s71
      %s73 = sshll.u32 %s3, 4
      %s74 = int_to_ptr.hbm [resolvable:$true] %s73
      %76 = dma.vmem_to_hbm [thread:$0]  %s72, 32, %s74, [#allocation4]
    $region21: #{tpu_custom_call.1} parent=1 // pred_fallthru
      _
    // Predicated region
    $region22: #{tpu_custom_call.1} parent=1 // pred_check
      _
    $region23: #{tpu_custom_call.1} parent=1 // pred_check_branch
      %78 = sbr.rel (0) target = $region25
    $region24: #{tpu_custom_call.1} parent=1 // pred_region
      %80 = dma.done [#allocation4], 32
    $region25: #{tpu_custom_call.1} parent=1 // pred_fallthru
      _
    %81 = vsyncpa [#allocation3], 1
    %82 = vsyncpa [#allocation4], 1

</llo_original>
